<compile_context>
chip_gen: v7x
topology: tpu7x:2x2x1
jax: 0.10.0
libtpu: 0.0.40
codegen_flags: <defaults>
</compile_context>

<pallas_src>
from functools import partial

import jax
import jax.numpy as jnp
from jax.experimental import pallas as pl
from jax.experimental.pallas import tpu as pltpu

LANE = 128
SLAB_R = 64                 # rows per inner slab (multiple of 8/16/32 packing)
MAX_TILE_R = 4096           # 4096 x 128 x 4B = 2 MiB per f32 input block


def _round_up(x, m):
    return ((x + m - 1) // m) * m


def _ktrans_loss_kernel(pred_ref, targ_ref, asum_ref, bsum_ref, *,
                        epsilon, rows_valid, tile_r, num_blocks,
                        blocks_per_chunk):
    o = pl.program_id(0)   # chunk (parallel; megacore shard on multi-TC chips)
    i = pl.program_id(1)   # row-block within chunk (arbitrary; accumulation)

    @pl.when(i == 0)
    def _init():
        asum_ref[...] = jnp.zeros_like(asum_ref)
        bsum_ref[...] = jnp.zeros_like(bsum_ref)

    # Intended (unclamped) global row-block index.  The index_map clamps the
    # DMA so it always stays in-bounds; the masked path below zeroes anything
    # we should not have read (partial tail block, or a duplicated overflow
    # block when num_blocks is not a multiple of the chunk count).
    b = o * blocks_per_chunk + i
    n_slabs = tile_r // SLAB_R
    unroll = max(1, min(4, n_slabs))

    def run(masked):
        # Stream the block in (SLAB_R, 128) slabs, carrying the partial sums
        # in vregs; one read-modify-write of the resident output block per
        # grid step.  No full-block d/db temporaries in VMEM.
        def body(j, carry):
            acc_a, acc_b = carry
            off = pl.multiple_of(j * SLAB_R, SLAB_R)
            p = pred_ref[pl.ds(off, SLAB_R), :].astype(jnp.float32)
            t = targ_ref[pl.ds(off, SLAB_R), :].astype(jnp.float32)
            if masked:
                row = (b * tile_r + off
                       + jax.lax.broadcasted_iota(jnp.int32, (SLAB_R, LANE), 0))
                ok = row < rows_valid
                p = jnp.where(ok, p, 0.0)   # hard-zero OOB garbage (NaN-safe)
                t = jnp.where(ok, t, 0.0)
            d = jnp.where(t > epsilon, jnp.abs(p - t), 0.0)
            return acc_a + d, acc_b + d * jnp.abs(t)

        zero = jnp.zeros((SLAB_R, LANE), jnp.float32)
        acc_a, acc_b = jax.lax.fori_loop(0, n_slabs, body, (zero, zero),
                                         unroll=unroll)
        asum_ref[...] += acc_a
        bsum_ref[...] += acc_b

    if num_blocks > 1:
        # Fast path: fully in-bounds interior blocks (no iota, no selects).
        @pl.when(b < num_blocks - 1)
        def _fast():
            run(masked=False)

        # Masked path: last real block (ragged tail) or clamped overflow
        # block (b >= num_blocks, fully zeroed by the row mask).
        @pl.when(b >= num_blocks - 1)
        def _tail():
            run(masked=True)
    else:
        run(masked=True)


def ktrans_weighted_l1_high_loss(predictions, target, seg=None, *,
                                 epsilon=0.05, beta=2.0):
    """Returns (loss, loss_alpha, loss_beta); `seg` is unused (as in PyTorch)."""
    assert predictions.shape == target.shape
    n = predictions.size

    pred_f = predictions.reshape(-1)
    targ_f = target.reshape(-1)

    # Pad only to a lane multiple when strictly necessary.  Padded pred/target
    # are zero, so |p - t| == 0 there and the contribution is exactly zero.
    pad = (-n) % LANE
    if pad:
        pred_f = jnp.pad(pred_f, (0, pad))
        targ_f = jnp.pad(targ_f, (0, pad))

    rows = pred_f.size // LANE
    pred2 = pred_f.reshape(rows, LANE)
    targ2 = targ_f.reshape(rows, LANE)

    # tile_r: multiple of SLAB_R (which covers 8/16/32 sublane packing for
    # f32/bf16/int8 inputs), capped at MAX_TILE_R.
    tile_r = min(_round_up(MAX_TILE_R, SLAB_R), _round_up(rows, SLAB_R))
    num_blocks = pl.cdiv(rows, tile_r)

    # Two outer chunks so multi-TensorCore chips can each stream half the
    # rows; harmless (serial loop + one masked duplicate block) on 1-TC chips.
    n_chunks = 2 if num_blocks >= 2 else 1
    blocks_per_chunk = pl.cdiv(num_blocks, n_chunks)

    def in_map(o, i):
        # Clamp so the DMA never walks past the array; overflow blocks are
        # fully masked out inside the kernel.
        return (jnp.minimum(o * blocks_per_chunk + i, num_blocks - 1), 0)

    kern = partial(_ktrans_loss_kernel,
                   epsilon=float(epsilon),
                   rows_valid=rows,
                   tile_r=tile_r,
                   num_blocks=num_blocks,
                   blocks_per_chunk=blocks_per_chunk)

    in_bytes = rows * LANE * (jnp.dtype(pred2.dtype).itemsize
                              + jnp.dtype(targ2.dtype).itemsize)
    out_bytes = 2 * n_chunks * SLAB_R * LANE * 4
    cost = pl.CostEstimate(flops=8 * rows * LANE,
                           transcendentals=0,
                           bytes_accessed=in_bytes + out_bytes)

    asum, bsum = pl.pallas_call(
        kern,
        out_shape=(jax.ShapeDtypeStruct((n_chunks * SLAB_R, LANE), jnp.float32),
                   jax.ShapeDtypeStruct((n_chunks * SLAB_R, LANE), jnp.float32)),
        grid_spec=pltpu.PrefetchScalarGridSpec(
            num_scalar_prefetch=0,
            grid=(n_chunks, blocks_per_chunk),
            in_specs=[pl.BlockSpec((tile_r, LANE), in_map),
                      pl.BlockSpec((tile_r, LANE), in_map)],
            out_specs=(pl.BlockSpec((SLAB_R, LANE), lambda o, i: (o, 0)),
                       pl.BlockSpec((SLAB_R, LANE), lambda o, i: (o, 0)))),
        compiler_params=pltpu.CompilerParams(
            dimension_semantics=("parallel", "arbitrary")),
        cost_estimate=cost,
    )(pred2, targ2)

    # Tiny epilogue: cross-lane reduce of the per-chunk partial sums + mean.
    inv_n = 1.0 / float(n)
    loss_alpha = jnp.sum(asum) * inv_n
    loss_beta = jnp.sum(bsum) * (abs(float(beta)) * inv_n)
    # TODO(synk): the PyTorch forward also print()s loss_alpha/loss_beta; we
    # return them instead of printing from the kernel.
    return loss_alpha + loss_beta, loss_alpha, loss_beta


def _reference(predictions, target, epsilon, beta):
    p = predictions.astype(jnp.float32)
    t = target.astype(jnp.float32)
    mask = (t > epsilon).astype(jnp.float32)
    w = t * beta
    la = jnp.mean(jnp.abs(p * mask - t * mask))
    lb = jnp.mean(jnp.abs(p * mask * w - t * mask * w))
    return la + lb, la, lb


if __name__ == "__main__":
    key = jax.random.PRNGKey(0)
    k1, k2, k3 = jax.random.split(key, 3)

    # Small NCHW shapes consistent with the module's usage.
    B, C, H, W = 2, 4, 16, 16
    predictions = jax.random.uniform(k1, (B, C, H, W), jnp.float32)
    target = jax.random.uniform(k2, (B, C, H, W), jnp.float32)
    seg = (jax.random.uniform(k3, (B, C, H, W)) > 0.5).astype(jnp.float32)  # unused

    epsilon, beta = 0.3, 2.0

    loss, la, lb = ktrans_weighted_l1_high_loss(
        predictions, target, seg, epsilon=epsilon, beta=beta)
    loss = jax.block_until_ready(loss)

    ref_loss, ref_la, ref_lb = _reference(predictions, target, epsilon, beta)
    assert jnp.allclose(loss, ref_loss, rtol=1e-5, atol=1e-6), (loss, ref_loss)
    assert jnp.allclose(la, ref_la, rtol=1e-5, atol=1e-6), (la, ref_la)
    assert jnp.allclose(lb, ref_lb, rtol=1e-5, atol=1e-6), (lb, ref_lb)

    print("KERNEL_OK")
</pallas_src>

<mosaic_0001>
module attributes {stable_mosaic.version = 11 : i64} {
  func.func @_ktrans_loss_kernel(%arg0: i32, %arg1: i32, %arg2: memref<64x128xf32, #tpu.memory_space<vmem>>, %arg3: memref<64x128xf32, #tpu.memory_space<vmem>>, %arg4: memref<64x128xf32, #tpu.memory_space<vmem>>, %arg5: memref<64x128xf32, #tpu.memory_space<vmem>>) attributes {dimension_semantics = [#tpu.dimension_semantics<parallel>, #tpu.dimension_semantics<arbitrary>], iteration_bounds = array<i64: 1, 1>, scalar_prefetch = 0 : i64, scratch_operands = 0 : i64, tpu.core_type = #tpu.core_type<tc>, window_params = [{transform_indices = @transform_0, window_bounds = array<i64: 64, 128>}, {transform_indices = @transform_1, window_bounds = array<i64: 64, 128>}, {transform_indices = @transform_2, window_bounds = array<i64: 64, 128>}, {transform_indices = @transform_3, window_bounds = array<i64: 64, 128>}]} {
    %c0_i32 = arith.constant 0 : i32
    %0 = arith.cmpi eq, %arg1, %c0_i32 : i32
    %1 = arith.extui %0 : i1 to i32
    %c0_i32_0 = arith.constant 0 : i32
    %2 = arith.cmpi ne, %1, %c0_i32_0 : i32
    scf.if %2 {
      %cst_17 = arith.constant 0.000000e+00 : f32
      %39 = vector.broadcast %cst_17 : f32 to vector<64x128xf32>
      %c0_18 = arith.constant 0 : index
      %c0_19 = arith.constant 0 : index
      %40 = vector.load %arg4[%c0_18, %c0_19] : memref<64x128xf32, #tpu.memory_space<vmem>>, vector<64x128xf32>
      tpu.vector_store %arg4[%c0_18, %c0_19], %39 {strides = array<i32>} : memref<64x128xf32, #tpu.memory_space<vmem>>, vector<64x128xf32>,
      %cst_20 = arith.constant 0.000000e+00 : f32
      %41 = vector.broadcast %cst_20 : f32 to vector<64x128xf32>
      %c0_21 = arith.constant 0 : index
      %c0_22 = arith.constant 0 : index
      %42 = vector.load %arg5[%c0_21, %c0_22] : memref<64x128xf32, #tpu.memory_space<vmem>>, vector<64x128xf32>
      tpu.vector_store %arg5[%c0_21, %c0_22], %41 {strides = array<i32>} : memref<64x128xf32, #tpu.memory_space<vmem>>, vector<64x128xf32>,
    } else {
    }
    %c1_i32 = arith.constant 1 : i32
    %3 = arith.muli %arg0, %c1_i32 : i32
    %4 = arith.addi %3, %arg1 : i32
    %cst = arith.constant 0.000000e+00 : f32
    %5 = vector.broadcast %cst : f32 to vector<64x128xf32>
    %c0_i32_1 = arith.constant 0 : i32
    %c64_i32 = arith.constant 64 : i32
    %6 = arith.muli %c0_i32_1, %c64_i32 : i32
    %7 = tpu.assume_multiple %6, 64 : i32
    %8 = arith.index_cast %7 : i32 to index
    %c0 = arith.constant 0 : index
    %9 = vector.load %arg2[%8, %c0] : memref<64x128xf32, #tpu.memory_space<vmem>>, vector<64x128xf32>
    %10 = arith.index_cast %7 : i32 to index
    %c0_2 = arith.constant 0 : index
    %11 = vector.load %arg3[%10, %c0_2] : memref<64x128xf32, #tpu.memory_space<vmem>>, vector<64x128xf32>
    %c64_i32_3 = arith.constant 64 : i32
    %12 = arith.muli %4, %c64_i32_3 : i32
    %13 = arith.addi %12, %7 : i32
    %14 = tpu.iota {dimensions = array<i32: 0>} : vector<64x128xi32>
    %15 = vector.broadcast %13 : i32 to vector<64x128xi32>
    %16 = arith.addi %15, %14 : vector<64x128xi32>
    %c16_i32 = arith.constant 16 : i32
    %17 = vector.broadcast %c16_i32 : i32 to vector<64x128xi32>
    %18 = arith.cmpi slt, %16, %17 : vector<64x128xi32>
    %cst_4 = arith.constant 0.000000e+00 : f32
    %19 = vector.broadcast %cst_4 : f32 to vector<64x128xf32>
    %20 = arith.select %18, %9, %19 : vector<64x128xi1>, vector<64x128xf32>
    %cst_5 = arith.constant 0.000000e+00 : f32
    %21 = vector.broadcast %cst_5 : f32 to vector<64x128xf32>
    %22 = arith.select %18, %11, %21 : vector<64x128xi1>, vector<64x128xf32>
    %cst_6 = arith.constant 3.000000e-01 : f32
    %23 = vector.broadcast %cst_6 : f32 to vector<64x128xf32>
    %24 = arith.cmpf ogt, %22, %23 : vector<64x128xf32>
    %25 = arith.subf %20, %22 : vector<64x128xf32>
    %26 = math.absf %25 : vector<64x128xf32>
    %cst_7 = arith.constant 0.000000e+00 : f32
    %27 = vector.broadcast %cst_7 : f32 to vector<64x128xf32>
    %28 = arith.select %24, %26, %27 : vector<64x128xi1>, vector<64x128xf32>
    %29 = arith.addf %5, %28 : vector<64x128xf32>
    %30 = math.absf %22 : vector<64x128xf32>
    %31 = arith.mulf %28, %30 : vector<64x128xf32>
    %32 = arith.addf %5, %31 : vector<64x128xf32>
    %c1_i32_8 = arith.constant 1 : i32
    %c0_9 = arith.constant 0 : index
    %c0_10 = arith.constant 0 : index
    %33 = vector.load %arg4[%c0_9, %c0_10] : memref<64x128xf32, #tpu.memory_space<vmem>>, vector<64x128xf32>
    %34 = arith.addf %33, %29 : vector<64x128xf32>
    %c0_11 = arith.constant 0 : index
    %c0_12 = arith.constant 0 : index
    %35 = vector.load %arg4[%c0_11, %c0_12] : memref<64x128xf32, #tpu.memory_space<vmem>>, vector<64x128xf32>
    tpu.vector_store %arg4[%c0_11, %c0_12], %34 {strides = array<i32>} : memref<64x128xf32, #tpu.memory_space<vmem>>, vector<64x128xf32>,
    %c0_13 = arith.constant 0 : index
    %c0_14 = arith.constant 0 : index
    %36 = vector.load %arg5[%c0_13, %c0_14] : memref<64x128xf32, #tpu.memory_space<vmem>>, vector<64x128xf32>
    %37 = arith.addf %36, %32 : vector<64x128xf32>
    %c0_15 = arith.constant 0 : index
    %c0_16 = arith.constant 0 : index
    %38 = vector.load %arg5[%c0_15, %c0_16] : memref<64x128xf32, #tpu.memory_space<vmem>>, vector<64x128xf32>
    tpu.vector_store %arg5[%c0_15, %c0_16], %37 {strides = array<i32>} : memref<64x128xf32, #tpu.memory_space<vmem>>, vector<64x128xf32>,
    return
  }
  func.func @transform_0(%arg0: i32, %arg1: i32) -> (i32, i32) {
    %c1_i32 = arith.constant 1 : i32
    %0 = arith.muli %arg0, %c1_i32 : i32
    %1 = arith.addi %0, %arg1 : i32
    %c0_i32 = arith.constant 0 : i32
    %2 = arith.minsi %1, %c0_i32 : i32
    %c0_i32_0 = arith.constant 0 : i32
    %c0_i32_1 = arith.constant 0 : i32
    return %2, %c0_i32_0 : i32, i32
  }
  func.func @transform_1(%arg0: i32, %arg1: i32) -> (i32, i32) {
    %c1_i32 = arith.constant 1 : i32
    %0 = arith.muli %arg0, %c1_i32 : i32
    %1 = arith.addi %0, %arg1 : i32
    %c0_i32 = arith.constant 0 : i32
    %2 = arith.minsi %1, %c0_i32 : i32
    %c0_i32_0 = arith.constant 0 : i32
    %c0_i32_1 = arith.constant 0 : i32
    return %2, %c0_i32_0 : i32, i32
  }
  func.func @transform_2(%arg0: i32, %arg1: i32) -> (i32, i32) {
    %c0_i32 = arith.constant 0 : i32
    %c0_i32_0 = arith.constant 0 : i32
    return %arg0, %c0_i32 : i32, i32
  }
  func.func @transform_3(%arg0: i32, %arg1: i32) -> (i32, i32) {
    %c0_i32 = arith.constant 0 : i32
    %c0_i32_0 = arith.constant 0 : i32
    return %arg0, %c0_i32 : i32, i32
  }
}

</mosaic_0001>

<llo_original>
// kernel: tpu_custom_call.1
$region0: #{tpu_custom_call.1}
  #allocation0 [shape = 'u32[]', space=smem, size = 0x4, offset = 0x4, fixed_abs, tag = 'smem constant byte address 0x4 - core index']
  #allocation1 [shape = 'u32[144,128]{1,0:T(1,128)}', space=vmem, size = 0x12000, scoped, tag = 'internal scratch']
  %s0 = inlined_call_operand.hbm [shape: f32[16,128], index: 0, kind: input, shape index: {}]
  %s1 = inlined_call_operand.hbm [shape: f32[16,128], index: 1, kind: input, shape index: {}]
  %s2 = inlined_call_operand.hbm [shape: f32[64,128], index: 2, kind: output, shape index: {0}]
  %s3 = inlined_call_operand.hbm [shape: f32[64,128], index: 3, kind: output, shape index: {1}]
  %4 = xla_tuple %s2, %s3
  %s5 = sld [smem:[#allocation0]]
  $region38: #{tpu_custom_call.1} parent=0
    _
  %s7 = ssub.s32 1, %s5
  %s8 = scalar_select 0, %s7, %s5
  $region1: #{tpu_custom_call.1} parent=0
    #allocation2 [shape = 'u8[32768]{0}', space=vmem, size = 0x8000, scoped, tag = 'input window, operand 0, single buffered']
    #allocation3 [shape = 's32[1]{0}', space=sflag, size = 0x4, scoped, tag = 'scoped memory for tpu_custom_call.1']
    #allocation4 [shape = 's32[1]{0}', space=sflag, size = 0x4, scoped, tag = 'scoped memory for tpu_custom_call.1']
    #allocation5 [shape = 'u8[32768]{0}', space=vmem, size = 0x8000, scoped, tag = 'input window, operand 1, single buffered']
    #allocation6 [shape = 's32[1]{0}', space=sflag, size = 0x4, scoped, tag = 'scoped memory for tpu_custom_call.1']
    #allocation7 [shape = 'u8[32768]{0}', space=vmem, size = 0x8000, scoped, tag = 'output window, operand 0, single buffered']
    #allocation8 [shape = 'u8[32768]{0}', space=vmem, size = 0x8000, scoped, tag = 'output window, operand 1, single buffered']
    #allocation9 [shape = 's32[1]{0}', space=sflag, size = 0x4, scoped, tag = 'scoped memory for tpu_custom_call.1']
    %9 = vsyncpa [#allocation3], 0
    %10 = vsyncpa [#allocation6], 0
    %11 = vsyncpa [#allocation4], 0
    %12 = vsyncpa [#allocation9], 0
    // Predicated region
    $region2: #{tpu_custom_call.1} parent=1 // pred_check
      _
    $region3: #{tpu_custom_call.1} parent=1 // pred_check_branch
      %14 = sbr.rel (0) target = $region5
    $region4: #{tpu_custom_call.1} parent=1 // pred_region
      %s15 = sadd.s32 0, 0
      %p16 = scmp.lt.s32.totalorder %s15, 0
      %s17 = scalar_select %p16, %s15, 0
      %s18 = smul.u32 8, %s17
      %s19 = ssub.s32 2, %s18
      %s20 = smul.u32 128, %s19
      %s22 = ssub.s32 1024, %s20
      %23 = vsyncadd [#allocation3], %s22
      %p24 = scmp.ne.s32.totalorder 0, %s20
      %s25 = smul.addr %s18, 128
      %s26 = scalar_lea.hbm %s0, %s25
      %s27 = smul.u32 8, %s19
      %s28 = sshll.u32 [#allocation2], 4
      %s29 = int_to_ptr.vmem [resolvable:$true] %s28
      %s30 = sshll.u32 %s27, 4
      %34 = dma.hbm_to_vmem [thread:$0]  (%p24), %s26, %s30, %s29, [#allocation3], 128, 128, 8
    $region5: #{tpu_custom_call.1} parent=1 // pred_fallthru
      _
    // Predicated region
    $region6: #{tpu_custom_call.1} parent=1 // pred_check
      _
    $region7: #{tpu_custom_call.1} parent=1 // pred_check_branch
      %36 = sbr.rel (0) target = $region9
    $region8: #{tpu_custom_call.1} parent=1 // pred_region
      %s37 = sadd.s32 0, 0
      %p38 = scmp.lt.s32.totalorder %s37, 0
      %s39 = scalar_select %p38, %s37, 0
      %s40 = smul.u32 8, %s39
      %s41 = ssub.s32 2, %s40
      %s42 = smul.u32 128, %s41
      %s44 = ssub.s32 1024, %s42
      %45 = vsyncadd [#allocation6], %s44
      %p46 = scmp.ne.s32.totalorder 0, %s42
      %s47 = smul.addr %s40, 128
      %s48 = scalar_lea.hbm %s1, %s47
      %s49 = smul.u32 8, %s41
      %s50 = sshll.u32 [#allocation5], 4
      %s51 = int_to_ptr.vmem [resolvable:$true] %s50
      %s52 = sshll.u32 %s49, 4
      %56 = dma.hbm_to_vmem [thread:$0]  (%p46), %s48, %s52, %s51, [#allocation6], 128, 128, 8
    $region9: #{tpu_custom_call.1} parent=1 // pred_fallthru
      _
    // Predicated region
    $region10: #{tpu_custom_call.1} parent=1 // pred_check
      _
    $region11: #{tpu_custom_call.1} parent=1 // pred_check_branch
      %58 = sbr.rel (0) target = $region13
    $region12: #{tpu_custom_call.1} parent=1 // pred_region
      %59 = dma.done [#allocation3], 1024
    $region13: #{tpu_custom_call.1} parent=1 // pred_fallthru
      _
    // Predicated region
    $region14: #{tpu_custom_call.1} parent=1 // pred_check
      _
    $region15: #{tpu_custom_call.1} parent=1 // pred_check_branch
      %61 = sbr.rel (0) target = $region17
    $region16: #{tpu_custom_call.1} parent=1 // pred_region
      %62 = dma.done [#allocation6], 1024
    $region17: #{tpu_custom_call.1} parent=1 // pred_fallthru
      _
    %s63 = sadd.s32 0, 0
    %p64 = scmp.lt.s32.totalorder %s63, 0
    %s65 = scalar_select %p64, %s63, 0
    %s66 = smul.u32 8, %s65
    %s67 = ssub.s32 2, %s66
    %s68 = smul.u32 128, %s67
    %s69 = sadd.s32 0, 0
    %p70 = scmp.lt.s32.totalorder %s69, 0
    %s71 = scalar_select %p70, %s69, 0
    %s72 = smul.u32 8, %s71
    %s73 = ssub.s32 2, %s72
    %s74 = smul.u32 128, %s73
    %p75 = scmp.eq.s32.totalorder 0, 0
    // Predicated region
    $region18: #{tpu_custom_call.1} parent=1 // pred_check
      %p76 = pneg %p75
    $region19: #{tpu_custom_call.1} parent=1 // pred_check_branch
      %78 = sbr.rel (%p76) target = $region21
    $region20: #{tpu_custom_call.1} parent=1 // pred_region
      %79 = vst [vmem:[#allocation7] sm:$0xff] 0.0
      %80 = vst [vmem:[#allocation7 + $0x8] sm:$0xff] 0.0
      %81 = vst [vmem:[#allocation7 + $0x10] sm:$0xff] 0.0
      %82 = vst [vmem:[#allocation7 + $0x18] sm:$0xff] 0.0
      %83 = vst [vmem:[#allocation7 + $0x20] sm:$0xff] 0.0
      %84 = vst [vmem:[#allocation7 + $0x28] sm:$0xff] 0.0
      %85 = vst [vmem:[#allocation7 + $0x30] sm:$0xff] 0.0
      %86 = vst [vmem:[#allocation7 + $0x38] sm:$0xff] 0.0
      %87 = vst [vmem:[#allocation8] sm:$0xff] 0.0
      %88 = vst [vmem:[#allocation8 + $0x8] sm:$0xff] 0.0
      %89 = vst [vmem:[#allocation8 + $0x10] sm:$0xff] 0.0
      %90 = vst [vmem:[#allocation8 + $0x18] sm:$0xff] 0.0
      %91 = vst [vmem:[#allocation8 + $0x20] sm:$0xff] 0.0
      %92 = vst [vmem:[#allocation8 + $0x28] sm:$0xff] 0.0
      %93 = vst [vmem:[#allocation8 + $0x30] sm:$0xff] 0.0
      %94 = vst [vmem:[#allocation8 + $0x38] sm:$0xff] 0.0
    $region21: #{tpu_custom_call.1} parent=1 // pred_fallthru
      _
    %s95 = sadd.s32 0, 0
    %v96 = vld [vmem:[#allocation2] sm:$0xff]
    %v97 = vld [vmem:[#allocation2 + $0x8] sm:$0xff]
    %v98 = vld [vmem:[#allocation2 + $0x10] sm:$0xff]
    %v99 = vld [vmem:[#allocation2 + $0x18] sm:$0xff]
    %v100 = vld [vmem:[#allocation2 + $0x20] sm:$0xff]
    %v101 = vld [vmem:[#allocation2 + $0x28] sm:$0xff]
    %v102 = vld [vmem:[#allocation2 + $0x30] sm:$0xff]
    %v103 = vld [vmem:[#allocation2 + $0x38] sm:$0xff]
    %v104 = vld [vmem:[#allocation5] sm:$0xff]
    %v105 = vld [vmem:[#allocation5 + $0x8] sm:$0xff]
    %v106 = vld [vmem:[#allocation5 + $0x10] sm:$0xff]
    %v107 = vld [vmem:[#allocation5 + $0x18] sm:$0xff]
    %v108 = vld [vmem:[#allocation5 + $0x20] sm:$0xff]
    %v109 = vld [vmem:[#allocation5 + $0x28] sm:$0xff]
    %v110 = vld [vmem:[#allocation5 + $0x30] sm:$0xff]
    %v111 = vld [vmem:[#allocation5 + $0x38] sm:$0xff]
    %s112 = smul.u32 %s95, 64
    %s113 = sadd.s32 %s112, 0
    %v114 = vlaneseq
    %v115 = vshrl.u32 %v114, 7
    %v116 = vadd.s32 %v115, 8
    %v117 = vadd.s32 %v115, 16
    %v118 = vadd.s32 %v115, 24
    %v119 = vadd.s32 %v115, 32
    %v120 = vadd.s32 %v115, 40
    %v121 = vadd.s32 %v115, 48
    %v122 = vadd.s32 %v115, 56
    %v123 = vstv %s113
    %v124 = vadd.s32 %v123, %v115
    %v125 = vadd.s32 %v123, %v116
    %v126 = vadd.s32 %v123, %v117
    %v127 = vadd.s32 %v123, %v118
    %v128 = vadd.s32 %v123, %v119
    %v129 = vadd.s32 %v123, %v120
    %v130 = vadd.s32 %v123, %v121
    %v131 = vadd.s32 %v123, %v122
    %vm132 = vcmp.lt.s32.totalorder %v124, 16
    %vm133 = vcmp.lt.s32.totalorder %v125, 16
    %vm134 = vcmp.lt.s32.totalorder %v126, 16
    %vm135 = vcmp.lt.s32.totalorder %v127, 16
    %vm136 = vcmp.lt.s32.totalorder %v128, 16
    %vm137 = vcmp.lt.s32.totalorder %v129, 16
    %vm138 = vcmp.lt.s32.totalorder %v130, 16
    %vm139 = vcmp.lt.s32.totalorder %v131, 16
    %v140 = vsel %vm132, %v96, 0.0
    %v141 = vsel %vm133, %v97, 0.0
    %v142 = vsel %vm134, %v98, 0.0
    %v143 = vsel %vm135, %v99, 0.0
    %v144 = vsel %vm136, %v100, 0.0
    %v145 = vsel %vm137, %v101, 0.0
    %v146 = vsel %vm138, %v102, 0.0
    %v147 = vsel %vm139, %v103, 0.0
    %v148 = vsel %vm132, %v104, 0.0
    %v149 = vsel %vm133, %v105, 0.0
    %v150 = vsel %vm134, %v106, 0.0
    %v151 = vsel %vm135, %v107, 0.0
    %v152 = vsel %vm136, %v108, 0.0
    %v153 = vsel %vm137, %v109, 0.0
    %v154 = vsel %vm138, %v110, 0.0
    %v155 = vsel %vm139, %v111, 0.0
    %vm156 = vcmp.gt.f32.partialorder %v148, 0.3
    %vm157 = vcmp.gt.f32.partialorder %v149, 0.3
    %vm158 = vcmp.gt.f32.partialorder %v150, 0.3
    %vm159 = vcmp.gt.f32.partialorder %v151, 0.3
    %vm160 = vcmp.gt.f32.partialorder %v152, 0.3
    %vm161 = vcmp.gt.f32.partialorder %v153, 0.3
    %vm162 = vcmp.gt.f32.partialorder %v154, 0.3
    %vm163 = vcmp.gt.f32.partialorder %v155, 0.3
    %v164 = vsub.f32 %v140, %v148
    %v165 = vsub.f32 %v141, %v149
    %v166 = vsub.f32 %v142, %v150
    %v167 = vsub.f32 %v143, %v151
    %v168 = vsub.f32 %v144, %v152
    %v169 = vsub.f32 %v145, %v153
    %v170 = vsub.f32 %v146, %v154
    %v171 = vsub.f32 %v147, %v155
    %v172 = vand.u32 2147483647, %v164
    %v173 = vand.u32 2147483647, %v165
    %v174 = vand.u32 2147483647, %v166
    %v175 = vand.u32 2147483647, %v167
    %v176 = vand.u32 2147483647, %v168
    %v177 = vand.u32 2147483647, %v169
    %v178 = vand.u32 2147483647, %v170
    %v179 = vand.u32 2147483647, %v171
    %v180 = vsel %vm156, %v172, 0.0
    %v181 = vsel %vm157, %v173, 0.0
    %v182 = vsel %vm158, %v174, 0.0
    %v183 = vsel %vm159, %v175, 0.0
    %v184 = vsel %vm160, %v176, 0.0
    %v185 = vsel %vm161, %v177, 0.0
    %v186 = vsel %vm162, %v178, 0.0
    %v187 = vsel %vm163, %v179, 0.0
    %v188 = vadd.f32 %v180, 0.0
    %v189 = vadd.f32 %v181, 0.0
    %v190 = vadd.f32 %v182, 0.0
    %v191 = vadd.f32 %v183, 0.0
    %v192 = vadd.f32 %v184, 0.0
    %v193 = vadd.f32 %v185, 0.0
    %v194 = vadd.f32 %v186, 0.0
    %v195 = vadd.f32 %v187, 0.0
    %v196 = vand.u32 2147483647, %v148
    %v197 = vand.u32 2147483647, %v149
    %v198 = vand.u32 2147483647, %v150
    %v199 = vand.u32 2147483647, %v151
    %v200 = vand.u32 2147483647, %v152
    %v201 = vand.u32 2147483647, %v153
    %v202 = vand.u32 2147483647, %v154
    %v203 = vand.u32 2147483647, %v155
    %v204 = vmul.f32 %v180, %v196
    %v205 = vmul.f32 %v181, %v197
    %v206 = vmul.f32 %v182, %v198
    %v207 = vmul.f32 %v183, %v199
    %v208 = vmul.f32 %v184, %v200
    %v209 = vmul.f32 %v185, %v201
    %v210 = vmul.f32 %v186, %v202
    %v211 = vmul.f32 %v187, %v203
    %v212 = vadd.f32 %v204, 0.0
    %v213 = vadd.f32 %v205, 0.0
    %v214 = vadd.f32 %v206, 0.0
    %v215 = vadd.f32 %v207, 0.0
    %v216 = vadd.f32 %v208, 0.0
    %v217 = vadd.f32 %v209, 0.0
    %v218 = vadd.f32 %v210, 0.0
    %v219 = vadd.f32 %v211, 0.0
    %v220 = vld [vmem:[#allocation7] sm:$0xff]
    %v221 = vld [vmem:[#allocation7 + $0x8] sm:$0xff]
    %v222 = vld [vmem:[#allocation7 + $0x10] sm:$0xff]
    %v223 = vld [vmem:[#allocation7 + $0x18] sm:$0xff]
    %v224 = vld [vmem:[#allocation7 + $0x20] sm:$0xff]
    %v225 = vld [vmem:[#allocation7 + $0x28] sm:$0xff]
    %v226 = vld [vmem:[#allocation7 + $0x30] sm:$0xff]
    %v227 = vld [vmem:[#allocation7 + $0x38] sm:$0xff]
    %v228 = vadd.f32 %v220, %v188
    %v229 = vadd.f32 %v221, %v189
    %v230 = vadd.f32 %v222, %v190
    %v231 = vadd.f32 %v223, %v191
    %v232 = vadd.f32 %v224, %v192
    %v233 = vadd.f32 %v225, %v193
    %v234 = vadd.f32 %v226, %v194
    %v235 = vadd.f32 %v227, %v195
    %236 = vst [vmem:[#allocation7] sm:$0xff] %v228
    %237 = vst [vmem:[#allocation7 + $0x8] sm:$0xff] %v229
    %238 = vst [vmem:[#allocation7 + $0x10] sm:$0xff] %v230
    %239 = vst [vmem:[#allocation7 + $0x18] sm:$0xff] %v231
    %240 = vst [vmem:[#allocation7 + $0x20] sm:$0xff] %v232
    %241 = vst [vmem:[#allocation7 + $0x28] sm:$0xff] %v233
    %242 = vst [vmem:[#allocation7 + $0x30] sm:$0xff] %v234
    %243 = vst [vmem:[#allocation7 + $0x38] sm:$0xff] %v235
    %v244 = vld [vmem:[#allocation8] sm:$0xff]
    %v245 = vld [vmem:[#allocation8 + $0x8] sm:$0xff]
    %v246 = vld [vmem:[#allocation8 + $0x10] sm:$0xff]
    %v247 = vld [vmem:[#allocation8 + $0x18] sm:$0xff]
    %v248 = vld [vmem:[#allocation8 + $0x20] sm:$0xff]
    %v249 = vld [vmem:[#allocation8 + $0x28] sm:$0xff]
    %v250 = vld [vmem:[#allocation8 + $0x30] sm:$0xff]
    %v251 = vld [vmem:[#allocation8 + $0x38] sm:$0xff]
    %v252 = vadd.f32 %v244, %v212
    %v253 = vadd.f32 %v245, %v213
    %v254 = vadd.f32 %v246, %v214
    %v255 = vadd.f32 %v247, %v215
    %v256 = vadd.f32 %v248, %v216
    %v257 = vadd.f32 %v249, %v217
    %v258 = vadd.f32 %v250, %v218
    %v259 = vadd.f32 %v251, %v219
    %260 = vst [vmem:[#allocation8] sm:$0xff] %v252
    %261 = vst [vmem:[#allocation8 + $0x8] sm:$0xff] %v253
    %262 = vst [vmem:[#allocation8 + $0x10] sm:$0xff] %v254
    %263 = vst [vmem:[#allocation8 + $0x18] sm:$0xff] %v255
    %264 = vst [vmem:[#allocation8 + $0x20] sm:$0xff] %v256
    %265 = vst [vmem:[#allocation8 + $0x28] sm:$0xff] %v257
    %266 = vst [vmem:[#allocation8 + $0x30] sm:$0xff] %v258
    %267 = vst [vmem:[#allocation8 + $0x38] sm:$0xff] %v259
    // Predicated region
    $region22: #{tpu_custom_call.1} parent=1 // pred_check
      _
    $region23: #{tpu_custom_call.1} parent=1 // pred_check_branch
      %269 = sbr.rel (0) target = $region25
    $region24: #{tpu_custom_call.1} parent=1 // pred_region
      %s271 = ssub.s32 1024, 1024
      %272 = vsyncadd [#allocation4], %s271
      %s273 = sshll.u32 [#allocation7], 4
      %s274 = int_to_ptr.vmem [resolvable:$true] %s273
      %279 = dma.vmem_to_hbm [thread:$0]  %s274, 1024, %s2, [#allocation4], 128, 128, 8
    $region25: #{tpu_custom_call.1} parent=1 // pred_fallthru
      _
    // Predicated region
    $region26: #{tpu_custom_call.1} parent=1 // pred_check
      _
    $region27: #{tpu_custom_call.1} parent=1 // pred_check_branch
      %281 = sbr.rel (0) target = $region29
    $region28: #{tpu_custom_call.1} parent=1 // pred_region
      %s283 = ssub.s32 1024, 1024
      %284 = vsyncadd [#allocation9], %s283
      %s285 = sshll.u32 [#allocation8], 4
      %s286 = int_to_ptr.vmem [resolvable:$true] %s285
      %291 = dma.vmem_to_hbm [thread:$0]  %s286, 1024, %s3, [#allocation9], 128, 128, 8
    $region29: #{tpu_custom_call.1} parent=1 // pred_fallthru
      _
    // Predicated region
    $region30: #{tpu_custom_call.1} parent=1 // pred_check
      _
    $region31: #{tpu_custom_call.1} parent=1 // pred_check_branch
      %293 = sbr.rel (0) target = $region33
    $region32: #{tpu_custom_call.1} parent=1 // pred_region
      %294 = dma.done [#allocation4], 1024
    $region33: #{tpu_custom_call.1} parent=1 // pred_fallthru
      _
    // Predicated region
    $region34: #{tpu_custom_call.1} parent=1 // pred_check
      _
    $region35: #{tpu_custom_call.1} parent=1 // pred_check_branch
      %296 = sbr.rel (0) target = $region37
    $region36: #{tpu_custom_call.1} parent=1 // pred_region
      %297 = dma.done [#allocation9], 1024
    $region37: #{tpu_custom_call.1} parent=1 // pred_fallthru
      _
    %298 = vsyncpa [#allocation3], 1
    %299 = vsyncpa [#allocation6], 1
    %300 = vsyncpa [#allocation4], 1
    %301 = vsyncpa [#allocation9], 1

</llo_original>
